<compile_context>
chip_gen: v5e
topology: v5e:2x2
jax: 0.10.0
libtpu: 0.0.40
codegen_flags: <defaults>
</compile_context>

<pallas_src>
import functools

import jax
import jax.numpy as jnp
from jax.experimental import pallas as pl
from jax.experimental.pallas import tpu as pltpu


def _stem_kernel(xt_ref, w_ref, m_ref, b_ref, o_ref, *, W, TR, Cout):
    """One (batch, row-tile) step of Conv2d(3x3, pad=1, s=1) + bias + ReLU.

    xt_ref: (Cin, (TR+2)*W)  halo'd input rows, flattened lane-dense (row-major)
    w_ref : (9, Cout, Cin)   conv taps, index = kh*3 + kw  (resident)
    m_ref : (2, TR*W)        0/1 column masks: [0] zero at w==0, [1] at w==W-1
    b_ref : (Cout, 1)        bias, f32 (resident)
    o_ref : (Cout, TR*W)     output tile (lane dim is a multiple of 128)
    """
    TRW = TR * W
    m_left = m_ref[0:1, :]     # kills lanes where w == 0      (needed for kw=0)
    m_right = m_ref[1:2, :]    # kills lanes where w == W - 1  (needed for kw=2)

    acc = jnp.zeros((Cout, TRW), jnp.float32)
    for kh in range(3):
        # Padded input rows [t*TR+kh, t*TR+kh+TR) == a static lane slice of the
        # halo'd tile at offset kh*W.
        base = xt_ref[:, kh * W:kh * W + TRW]                       # (Cin, TRW)
        # kw = 0 / 2 are +-1 flat-lane shifts of the same rows; the cyclic roll
        # only wraps into lanes that the column mask zeroes (width zero-pad).
        left = pltpu.roll(base, shift=1, axis=1) * m_left
        right = pltpu.roll(base, shift=TRW - 1, axis=1) * m_right
        acc += jnp.dot(w_ref[kh * 3 + 0], left,
                       preferred_element_type=jnp.float32)
        acc += jnp.dot(w_ref[kh * 3 + 1], base,
                       preferred_element_type=jnp.float32)
        acc += jnp.dot(w_ref[kh * 3 + 2], right,
                       preferred_element_type=jnp.float32)

    o_ref[...] = jnp.maximum(acc + b_ref[...], 0.0).astype(o_ref.dtype)


def _pick_row_tile(H, W, max_lanes):
    """Largest row count TR dividing H with TR*W a multiple of 128 and within
    max_lanes; prefer TR < H so each image gives >= 2 grid steps (pipelining /
    megacore).  Fall back to the full image (full-dim block is always legal)."""
    cands = [tr for tr in range(1, H + 1)
             if H % tr == 0 and (tr * W) % 128 == 0 and tr * W <= max_lanes]
    proper = [tr for tr in cands if tr < H]
    if proper:
        return max(proper)
    if cands:
        return max(cands)
    return H


def resnet_stem_pallas(x_nchw, w_oihw, bias, *, row_tile=None,
                       stream_dtype=None, out_dtype=None, max_tile_lanes=8192):
    """Conv2d(k=3, s=1, p=1) + ReLU.  x_nchw: (N, Cin, H, W) -> (N, Cout, H, W)."""
    N, Cin, H, W = x_nchw.shape
    Cout = w_oihw.shape[0]
    HW = H * W
    s_dtype = jnp.dtype(stream_dtype) if stream_dtype is not None else x_nchw.dtype
    o_dtype = jnp.dtype(out_dtype) if out_dtype is not None else x_nchw.dtype

    TR = row_tile if row_tile is not None else _pick_row_tile(H, W, max_tile_lanes)
    assert H % TR == 0, "row tile must divide H"
    assert (TR * W) % 128 == 0 or TR == H, \
        "row tile must give a lane dim that is a multiple of 128 (or the full image)"
    T = H // TR
    TRW = TR * W
    HALO_W = (TR + 2) * W

    # Height zero-pad (conv padding) + split into T row tiles with a 1-row halo
    # above/below, flattened to the lane-dense (row*W) layout.  HBM only ever
    # sees ~1.06x of the raw input -- no 9x im2col patches.
    x_hpad = jnp.pad(x_nchw.astype(s_dtype), ((0, 0), (0, 0), (1, 1), (0, 0)))
    tiles = jnp.stack(
        [x_hpad[:, :, t * TR:t * TR + TR + 2, :] for t in range(T)], axis=1)
    tiles = tiles.reshape(N, T, Cin, HALO_W)

    # Conv taps reordered to (kh*3+kw, Cout, Cin); bias kept in f32.
    w_taps = jnp.transpose(w_oihw, (2, 3, 0, 1)).reshape(9, Cout, Cin).astype(s_dtype)
    b2d = bias.astype(jnp.float32).reshape(Cout, 1)

    # 0/1 column masks implementing the width zero-padding (computed once,
    # resident in VMEM; avoids any in-kernel iota/mod).
    col = jnp.arange(TRW, dtype=jnp.int32) % W
    masks = jnp.stack([(col != 0), (col != W - 1)]).astype(s_dtype)      # (2, TRW)

    kernel = functools.partial(_stem_kernel, W=W, TR=TR, Cout=Cout)

    flops = 2 * N * Cout * 9 * Cin * HW
    bytes_accessed = (tiles.size * tiles.dtype.itemsize
                      + w_taps.size * w_taps.dtype.itemsize
                      + masks.size * masks.dtype.itemsize
                      + b2d.size * b2d.dtype.itemsize
                      + N * Cout * HW * jnp.dtype(o_dtype).itemsize)

    out = pl.pallas_call(
        kernel,
        out_shape=jax.ShapeDtypeStruct((N, Cout, HW), o_dtype),
        grid_spec=pltpu.PrefetchScalarGridSpec(
            num_scalar_prefetch=0,
            grid=(N, T),
            in_specs=[
                pl.BlockSpec((None, None, Cin, HALO_W), lambda n, t: (n, t, 0, 0)),
                pl.BlockSpec((9, Cout, Cin), lambda n, t: (0, 0, 0)),   # resident
                pl.BlockSpec((2, TRW), lambda n, t: (0, 0)),            # resident
                pl.BlockSpec((Cout, 1), lambda n, t: (0, 0)),           # resident
            ],
            out_specs=pl.BlockSpec((None, Cout, TRW), lambda n, t: (n, 0, t)),
        ),
        compiler_params=pltpu.CompilerParams(
            dimension_semantics=("parallel", "parallel"),
            vmem_limit_bytes=32 * 1024 * 1024,
        ),
        cost_estimate=pl.CostEstimate(flops=flops, transcendentals=0,
                                      bytes_accessed=bytes_accessed),
    )(tiles, w_taps, masks, b2d)

    return out.reshape(N, Cout, H, W)


def resnet_stem_ref(x_nchw, w_oihw, bias):
    """Pure-JAX reference matching PyTorch Conv2d(k=3, p=1, s=1) + ReLU."""
    y = jax.lax.conv_general_dilated(
        x_nchw, w_oihw,
        window_strides=(1, 1),
        padding=((1, 1), (1, 1)),
        dimension_numbers=("NCHW", "OIHW", "NCHW"),
    )
    y = y + bias.reshape(1, -1, 1, 1)
    return jnp.maximum(y, 0.0)


if __name__ == "__main__":
    # Small shapes consistent with the module defaults: Cin=3, Cout=8.
    N, Cin, Cout, H, W = 2, 3, 8, 16, 16

    key = jax.random.PRNGKey(0)
    kx, kw, kb = jax.random.split(key, 3)

    x = jax.random.normal(kx, (N, Cin, H, W), dtype=jnp.float32)

    # Deterministic PyTorch-like uniform(-1/sqrt(fan_in), +) init.
    fan_in = Cin * 3 * 3
    bound = 1.0 / (fan_in ** 0.5)
    w = jax.random.uniform(kw, (Cout, Cin, 3, 3), jnp.float32, -bound, bound)
    b = jax.random.uniform(kb, (Cout,), jnp.float32, -bound, bound)

    ref = jax.block_until_ready(resnet_stem_ref(x, w, b))

    # f32, auto row tiling (TR=8 -> grid (2, 2), 128-lane output tiles).
    out = jax.block_until_ready(resnet_stem_pallas(x, w, b))
    assert out.shape == (N, Cout, H, W), out.shape
    assert jnp.allclose(out, ref, atol=1e-5, rtol=1e-5), float(
        jnp.max(jnp.abs(out - ref)))

    # Single-tile path (whole image per step) must match too.
    out_full = jax.block_until_ready(resnet_stem_pallas(x, w, b, row_tile=H))
    assert jnp.allclose(out_full, ref, atol=1e-5, rtol=1e-5), float(
        jnp.max(jnp.abs(out_full - ref)))

    # bf16-streamed variant (halves the dominant HBM streams); f32 accumulate.
    out_bf16 = jax.block_until_ready(
        resnet_stem_pallas(x, w, b, stream_dtype=jnp.bfloat16,
                           out_dtype=jnp.float32))
    assert jnp.allclose(out_bf16, ref, atol=3e-2, rtol=3e-2), float(
        jnp.max(jnp.abs(out_bf16 - ref)))

    print("KERNEL_OK")
</pallas_src>

<mosaic_0001>
module attributes {stable_mosaic.version = 11 : i64} {
  func.func @_stem_kernel(%arg0: i32, %arg1: i32, %arg2: memref<1x1x3x160xf32, #tpu.memory_space<vmem>>, %arg3: memref<9x8x3xf32, #tpu.memory_space<vmem>>, %arg4: memref<2x128xf32, #tpu.memory_space<vmem>>, %arg5: memref<8x1xf32, #tpu.memory_space<vmem>>, %arg6: memref<1x8x128xf32, #tpu.memory_space<vmem>>) attributes {dimension_semantics = [#tpu.dimension_semantics<parallel>, #tpu.dimension_semantics<parallel>], iteration_bounds = array<i64: 2, 2>, scalar_prefetch = 0 : i64, scratch_operands = 0 : i64, tpu.core_type = #tpu.core_type<tc>, window_params = [{transform_indices = @transform_0, window_bounds = array<i64: 1, 1, 3, 160>}, {pipeline_mode = #tpu.pipeline_mode<synchronous>, transform_indices = @transform_1, window_bounds = array<i64: 9, 8, 3>}, {pipeline_mode = #tpu.pipeline_mode<synchronous>, transform_indices = @transform_2, window_bounds = array<i64: 2, 128>}, {pipeline_mode = #tpu.pipeline_mode<synchronous>, transform_indices = @transform_3, window_bounds = array<i64: 8, 1>}, {transform_indices = @transform_4, window_bounds = array<i64: 1, 8, 128>}]} {
    %c0 = arith.constant 0 : index
    %c0_0 = arith.constant 0 : index
    %0 = vector.load %arg4[%c0, %c0_0] : memref<2x128xf32, #tpu.memory_space<vmem>>, vector<1x128xf32>
    %c1 = arith.constant 1 : index
    %c0_1 = arith.constant 0 : index
    %1 = vector.load %arg4[%c1, %c0_1] : memref<2x128xf32, #tpu.memory_space<vmem>>, vector<1x128xf32>
    %cst = arith.constant 0.000000e+00 : f32
    %2 = vector.broadcast %cst : f32 to vector<8x128xf32>
    %c0_2 = arith.constant 0 : index
    %c0_3 = arith.constant 0 : index
    %c0_4 = arith.constant 0 : index
    %c0_5 = arith.constant 0 : index
    %3 = vector.load %arg2[%c0_2, %c0_3, %c0_4, %c0_5] : memref<1x1x3x160xf32, #tpu.memory_space<vmem>>, vector<1x1x3x128xf32>
    %4 = vector.shape_cast %3 : vector<1x1x3x128xf32> to vector<3x128xf32>
    %c1_i32 = arith.constant 1 : i32
    %5 = tpu.dynamic_rotate %4 by %c1_i32 dim 1 : vector<3x128xf32>, i32 -> vector<3x128xf32>
    %6 = vector.broadcast %0 : vector<1x128xf32> to vector<3x128xf32>
    %7 = arith.mulf %5, %6 : vector<3x128xf32>
    %c127_i32 = arith.constant 127 : i32
    %8 = tpu.dynamic_rotate %4 by %c127_i32 dim 1 : vector<3x128xf32>, i32 -> vector<3x128xf32>
    %9 = vector.broadcast %1 : vector<1x128xf32> to vector<3x128xf32>
    %10 = arith.mulf %8, %9 : vector<3x128xf32>
    %c0_6 = arith.constant 0 : index
    %c0_7 = arith.constant 0 : index
    %c0_8 = arith.constant 0 : index
    %11 = vector.load %arg3[%c0_6, %c0_7, %c0_8] : memref<9x8x3xf32, #tpu.memory_space<vmem>>, vector<1x8x3xf32>
    %12 = vector.shape_cast %11 : vector<1x8x3xf32> to vector<8x3xf32>
    %cst_9 = arith.constant dense<0.000000e+00> : vector<8x128xf32>
    %13 = tpu.matmul %12, %7, %cst_9 {dimension_numbers = #tpu.dot_dimension_numbers<[1], [0], [0], [1], [0, 0, 1, 1], [], []>} : vector<8x3xf32>, vector<3x128xf32>, vector<8x128xf32> -> vector<8x128xf32>
    %14 = arith.addf %2, %13 : vector<8x128xf32>
    %c1_10 = arith.constant 1 : index
    %c0_11 = arith.constant 0 : index
    %c0_12 = arith.constant 0 : index
    %15 = vector.load %arg3[%c1_10, %c0_11, %c0_12] : memref<9x8x3xf32, #tpu.memory_space<vmem>>, vector<1x8x3xf32>
    %16 = vector.shape_cast %15 : vector<1x8x3xf32> to vector<8x3xf32>
    %cst_13 = arith.constant dense<0.000000e+00> : vector<8x128xf32>
    %17 = tpu.matmul %16, %4, %cst_13 {dimension_numbers = #tpu.dot_dimension_numbers<[1], [0], [0], [1], [0, 0, 1, 1], [], []>} : vector<8x3xf32>, vector<3x128xf32>, vector<8x128xf32> -> vector<8x128xf32>
    %18 = arith.addf %14, %17 : vector<8x128xf32>
    %c2 = arith.constant 2 : index
    %c0_14 = arith.constant 0 : index
    %c0_15 = arith.constant 0 : index
    %19 = vector.load %arg3[%c2, %c0_14, %c0_15] : memref<9x8x3xf32, #tpu.memory_space<vmem>>, vector<1x8x3xf32>
    %20 = vector.shape_cast %19 : vector<1x8x3xf32> to vector<8x3xf32>
    %cst_16 = arith.constant dense<0.000000e+00> : vector<8x128xf32>
    %21 = tpu.matmul %20, %10, %cst_16 {dimension_numbers = #tpu.dot_dimension_numbers<[1], [0], [0], [1], [0, 0, 1, 1], [], []>} : vector<8x3xf32>, vector<3x128xf32>, vector<8x128xf32> -> vector<8x128xf32>
    %22 = arith.addf %18, %21 : vector<8x128xf32>
    %c0_17 = arith.constant 0 : index
    %c0_18 = arith.constant 0 : index
    %c0_19 = arith.constant 0 : index
    %c16 = arith.constant 16 : index
    %23 = vector.load %arg2[%c0_17, %c0_18, %c0_19, %c16] : memref<1x1x3x160xf32, #tpu.memory_space<vmem>>, vector<1x1x3x128xf32>
    %24 = vector.shape_cast %23 : vector<1x1x3x128xf32> to vector<3x128xf32>
    %c1_i32_20 = arith.constant 1 : i32
    %25 = tpu.dynamic_rotate %24 by %c1_i32_20 dim 1 : vector<3x128xf32>, i32 -> vector<3x128xf32>
    %26 = vector.broadcast %0 : vector<1x128xf32> to vector<3x128xf32>
    %27 = arith.mulf %25, %26 : vector<3x128xf32>
    %c127_i32_21 = arith.constant 127 : i32
    %28 = tpu.dynamic_rotate %24 by %c127_i32_21 dim 1 : vector<3x128xf32>, i32 -> vector<3x128xf32>
    %29 = vector.broadcast %1 : vector<1x128xf32> to vector<3x128xf32>
    %30 = arith.mulf %28, %29 : vector<3x128xf32>
    %c3 = arith.constant 3 : index
    %c0_22 = arith.constant 0 : index
    %c0_23 = arith.constant 0 : index
    %31 = vector.load %arg3[%c3, %c0_22, %c0_23] : memref<9x8x3xf32, #tpu.memory_space<vmem>>, vector<1x8x3xf32>
    %32 = vector.shape_cast %31 : vector<1x8x3xf32> to vector<8x3xf32>
    %cst_24 = arith.constant dense<0.000000e+00> : vector<8x128xf32>
    %33 = tpu.matmul %32, %27, %cst_24 {dimension_numbers = #tpu.dot_dimension_numbers<[1], [0], [0], [1], [0, 0, 1, 1], [], []>} : vector<8x3xf32>, vector<3x128xf32>, vector<8x128xf32> -> vector<8x128xf32>
    %34 = arith.addf %22, %33 : vector<8x128xf32>
    %c4 = arith.constant 4 : index
    %c0_25 = arith.constant 0 : index
    %c0_26 = arith.constant 0 : index
    %35 = vector.load %arg3[%c4, %c0_25, %c0_26] : memref<9x8x3xf32, #tpu.memory_space<vmem>>, vector<1x8x3xf32>
    %36 = vector.shape_cast %35 : vector<1x8x3xf32> to vector<8x3xf32>
    %cst_27 = arith.constant dense<0.000000e+00> : vector<8x128xf32>
    %37 = tpu.matmul %36, %24, %cst_27 {dimension_numbers = #tpu.dot_dimension_numbers<[1], [0], [0], [1], [0, 0, 1, 1], [], []>} : vector<8x3xf32>, vector<3x128xf32>, vector<8x128xf32> -> vector<8x128xf32>
    %38 = arith.addf %34, %37 : vector<8x128xf32>
    %c5 = arith.constant 5 : index
    %c0_28 = arith.constant 0 : index
    %c0_29 = arith.constant 0 : index
    %39 = vector.load %arg3[%c5, %c0_28, %c0_29] : memref<9x8x3xf32, #tpu.memory_space<vmem>>, vector<1x8x3xf32>
    %40 = vector.shape_cast %39 : vector<1x8x3xf32> to vector<8x3xf32>
    %cst_30 = arith.constant dense<0.000000e+00> : vector<8x128xf32>
    %41 = tpu.matmul %40, %30, %cst_30 {dimension_numbers = #tpu.dot_dimension_numbers<[1], [0], [0], [1], [0, 0, 1, 1], [], []>} : vector<8x3xf32>, vector<3x128xf32>, vector<8x128xf32> -> vector<8x128xf32>
    %42 = arith.addf %38, %41 : vector<8x128xf32>
    %c0_31 = arith.constant 0 : index
    %c0_32 = arith.constant 0 : index
    %c0_33 = arith.constant 0 : index
    %c32 = arith.constant 32 : index
    %43 = vector.load %arg2[%c0_31, %c0_32, %c0_33, %c32] : memref<1x1x3x160xf32, #tpu.memory_space<vmem>>, vector<1x1x3x128xf32>
    %44 = vector.shape_cast %43 : vector<1x1x3x128xf32> to vector<3x128xf32>
    %c1_i32_34 = arith.constant 1 : i32
    %45 = tpu.dynamic_rotate %44 by %c1_i32_34 dim 1 : vector<3x128xf32>, i32 -> vector<3x128xf32>
    %46 = vector.broadcast %0 : vector<1x128xf32> to vector<3x128xf32>
    %47 = arith.mulf %45, %46 : vector<3x128xf32>
    %c127_i32_35 = arith.constant 127 : i32
    %48 = tpu.dynamic_rotate %44 by %c127_i32_35 dim 1 : vector<3x128xf32>, i32 -> vector<3x128xf32>
    %49 = vector.broadcast %1 : vector<1x128xf32> to vector<3x128xf32>
    %50 = arith.mulf %48, %49 : vector<3x128xf32>
    %c6 = arith.constant 6 : index
    %c0_36 = arith.constant 0 : index
    %c0_37 = arith.constant 0 : index
    %51 = vector.load %arg3[%c6, %c0_36, %c0_37] : memref<9x8x3xf32, #tpu.memory_space<vmem>>, vector<1x8x3xf32>
    %52 = vector.shape_cast %51 : vector<1x8x3xf32> to vector<8x3xf32>
    %cst_38 = arith.constant dense<0.000000e+00> : vector<8x128xf32>
    %53 = tpu.matmul %52, %47, %cst_38 {dimension_numbers = #tpu.dot_dimension_numbers<[1], [0], [0], [1], [0, 0, 1, 1], [], []>} : vector<8x3xf32>, vector<3x128xf32>, vector<8x128xf32> -> vector<8x128xf32>
    %54 = arith.addf %42, %53 : vector<8x128xf32>
    %c7 = arith.constant 7 : index
    %c0_39 = arith.constant 0 : index
    %c0_40 = arith.constant 0 : index
    %55 = vector.load %arg3[%c7, %c0_39, %c0_40] : memref<9x8x3xf32, #tpu.memory_space<vmem>>, vector<1x8x3xf32>
    %56 = vector.shape_cast %55 : vector<1x8x3xf32> to vector<8x3xf32>
    %cst_41 = arith.constant dense<0.000000e+00> : vector<8x128xf32>
    %57 = tpu.matmul %56, %44, %cst_41 {dimension_numbers = #tpu.dot_dimension_numbers<[1], [0], [0], [1], [0, 0, 1, 1], [], []>} : vector<8x3xf32>, vector<3x128xf32>, vector<8x128xf32> -> vector<8x128xf32>
    %58 = arith.addf %54, %57 : vector<8x128xf32>
    %c8 = arith.constant 8 : index
    %c0_42 = arith.constant 0 : index
    %c0_43 = arith.constant 0 : index
    %59 = vector.load %arg3[%c8, %c0_42, %c0_43] : memref<9x8x3xf32, #tpu.memory_space<vmem>>, vector<1x8x3xf32>
    %60 = vector.shape_cast %59 : vector<1x8x3xf32> to vector<8x3xf32>
    %cst_44 = arith.constant dense<0.000000e+00> : vector<8x128xf32>
    %61 = tpu.matmul %60, %50, %cst_44 {dimension_numbers = #tpu.dot_dimension_numbers<[1], [0], [0], [1], [0, 0, 1, 1], [], []>} : vector<8x3xf32>, vector<3x128xf32>, vector<8x128xf32> -> vector<8x128xf32>
    %62 = arith.addf %58, %61 : vector<8x128xf32>
    %c0_45 = arith.constant 0 : index
    %c0_46 = arith.constant 0 : index
    %63 = vector.load %arg5[%c0_45, %c0_46] : memref<8x1xf32, #tpu.memory_space<vmem>>, vector<8x1xf32>
    %64 = vector.broadcast %63 : vector<8x1xf32> to vector<8x128xf32>
    %65 = arith.addf %62, %64 : vector<8x128xf32>
    %cst_47 = arith.constant 0.000000e+00 : f32
    %66 = vector.broadcast %cst_47 : f32 to vector<8x128xf32>
    %67 = arith.maximumf %65, %66 : vector<8x128xf32>
    %c0_48 = arith.constant 0 : index
    %c0_49 = arith.constant 0 : index
    %c0_50 = arith.constant 0 : index
    %68 = vector.load %arg6[%c0_48, %c0_49, %c0_50] : memref<1x8x128xf32, #tpu.memory_space<vmem>>, vector<1x8x128xf32>
    %69 = vector.shape_cast %68 : vector<1x8x128xf32> to vector<8x128xf32>
    %70 = vector.shape_cast %67 : vector<8x128xf32> to vector<1x8x128xf32>
    tpu.vector_store %arg6[%c0_48, %c0_49, %c0_50], %70 {strides = array<i32>} : memref<1x8x128xf32, #tpu.memory_space<vmem>>, vector<1x8x128xf32>,
    return
  }
  func.func @transform_0(%arg0: i32, %arg1: i32) -> (i32, i32, i32, i32) {
    %c0_i32 = arith.constant 0 : i32
    %c0_i32_0 = arith.constant 0 : i32
    %c0_i32_1 = arith.constant 0 : i32
    return %arg0, %arg1, %c0_i32, %c0_i32_0 : i32, i32, i32, i32
  }
  func.func @transform_1(%arg0: i32, %arg1: i32) -> (i32, i32, i32) {
    %c0_i32 = arith.constant 0 : i32
    %c0_i32_0 = arith.constant 0 : i32
    %c0_i32_1 = arith.constant 0 : i32
    %c0_i32_2 = arith.constant 0 : i32
    return %c0_i32, %c0_i32_0, %c0_i32_1 : i32, i32, i32
  }
  func.func @transform_2(%arg0: i32, %arg1: i32) -> (i32, i32) {
    %c0_i32 = arith.constant 0 : i32
    %c0_i32_0 = arith.constant 0 : i32
    %c0_i32_1 = arith.constant 0 : i32
    return %c0_i32, %c0_i32_0 : i32, i32
  }
  func.func @transform_3(%arg0: i32, %arg1: i32) -> (i32, i32) {
    %c0_i32 = arith.constant 0 : i32
    %c0_i32_0 = arith.constant 0 : i32
    %c0_i32_1 = arith.constant 0 : i32
    return %c0_i32, %c0_i32_0 : i32, i32
  }
  func.func @transform_4(%arg0: i32, %arg1: i32) -> (i32, i32, i32) {
    %c0_i32 = arith.constant 0 : i32
    %c0_i32_0 = arith.constant 0 : i32
    return %arg0, %c0_i32, %arg1 : i32, i32, i32
  }
}

</mosaic_0001>

<llo_original>
// kernel: tpu_custom_call.1
$region0: #{tpu_custom_call.1}
  #allocation0 [shape = 'u32[]', space=smem, size = 0x4, offset = 0x4, fixed_abs, tag = 'smem constant byte address 0x4 - core index']
  #allocation1 [shape = 'u32[72,128]{1,0:T(1,128)}', space=vmem, size = 0x9000, scoped, tag = 'internal scratch']
  %s0 = inlined_call_operand.vmem [shape: f32[2,2,3,160], index: 0, kind: input, shape index: {}]
  %s1 = inlined_call_operand.vmem [shape: f32[9,8,3], index: 1, kind: input, shape index: {}]
  %s2 = inlined_call_operand.vmem [shape: f32[2,128], index: 2, kind: input, shape index: {}]
  %s3 = inlined_call_operand.vmem [shape: f32[8,1], index: 3, kind: input, shape index: {}]
  %s4 = inlined_call_operand.hbm [shape: f32[2,8,256], index: 4, kind: output, shape index: {}]
  %s5 = sld [smem:[#allocation0]]
  $region49: #{tpu_custom_call.1} parent=0
    _
  %s7 = ssub.s32 1, %s5
  %s8 = scalar_select 0, %s7, %s5
  $region1: #{tpu_custom_call.1} parent=0
    #allocation2 [shape = 'u8[8192]{0}', space=vmem, size = 0x2000, scoped, tag = 'output window, operand 0']
    #allocation3 [shape = 's32[2]{0}', space=sflag, size = 0x8, scoped, tag = 'scoped memory for tpu_custom_call.1']
    %9 = vsyncpa [#allocation3], 0
    %s10 = scalar_lea.sflag [#allocation3], 1
    %11 = vsyncpa %s10, 0
    loop: start=0, step=1, limit=6
    $region2: #{tpu_custom_call.1} parent=1 // loop_pre_header
      _
    $region3: #{tpu_custom_call.1} parent=1 // loop_header
      %s13 = sphi 0, %s17
      %p14 = scmp.ge.s32.totalorder %s13, 6
      %s20 = sphi 0, %s32
      %s21 = sphi 0, %s28
      %s22 = sphi 0, %s20
      %s23 = sphi 0, %s21
      %s24 = sphi 0, %s22
      %s25 = sphi 0, %s23
      %s37 = sphi 0, %s39
      %s40 = sphi 0, %s37
      %s41 = sphi 0, %s40
      %s57 = sphi 0, %s41
      %s61 = sphi 0, %s61
      %s63 = sphi 0, %s61
      %s64 = sphi 0, %s63
      %s78 = sphi 0, %s64
      %s82 = sphi 0, %s82
      %s84 = sphi 0, %s82
      %s85 = sphi 0, %s84
      %s99 = sphi 0, %s85
      %s103 = sphi 0, %s103
      %s105 = sphi 0, %s103
      %s106 = sphi 0, %s105
      %s120 = sphi 0, %s106
      %s128 = sphi 0, %s130
      %s131 = sphi 0, %s128
      %s132 = sphi 0, %s131
      %s148 = sphi 0, %s132
    $region4: #{tpu_custom_call.1} parent=1 // loop_header_branch
      %16 = sbr.rel (%p14) target = $region8
    $region5: #{tpu_custom_call.1} parent=1 // loop_body
      %s18 = ssub.s32 %s13, 1
      %s19 = ssub.s32 %s13, 2
      %s26 = sadd.s32 1, %s21
      %p27 = scmp.ge.s32.totalorder %s26, 2
      %s28 = scalar_select %p27, 0, %s26
      %s29 = sadd.s32 1, %s20
      %s30 = scalar_select %p27, %s29, %s20
      %p31 = scmp.ge.s32.totalorder %s30, 2
      %s32 = scalar_select %p31, 0, %s30
      %s33 = ssub.s32 %s20, %s32
      %s34 = ssub.s32 %s21, %s28
      %s35 = sor.u32 %s33, %s34
      %p36 = scmp.eq.s32.totalorder %s35, 0
      %s38 = sadd.s32 %s37, 1
      %s39 = scalar_select %p36, %s37, %s38
      %p42 = pneg %p36
      %p43 = scmp.eq.s32.totalorder %s13, 3
      %p44 = por %p42, %p43
      %p45 = scmp.ne.s32.totalorder %s37, %s40
      %p46 = scmp.eq.s32.totalorder %s13, 0
      %p47 = por %p45, %p46
      %p48 = scmp.ne.s32.totalorder %s37, %s40
      %p49 = scmp.eq.s32.totalorder %s18, 3
      %p50 = por %p48, %p49
      %p51 = scmp.ne.s32.totalorder %s40, %s41
      %p52 = scmp.eq.s32.totalorder %s18, 0
      %p53 = por %p51, %p52
      %p54 = scmp.ne.s32.totalorder %s40, %s41
      %p55 = scmp.eq.s32.totalorder %s19, 3
      %p56 = por %p54, %p55
      %p58 = scmp.ne.s32.totalorder %s41, %s57
      %p59 = scmp.eq.s32.totalorder %s19, 0
      %p60 = por %p58, %p59
      %s62 = sadd.s32 %s61, 1
      %p65 = scmp.eq.s32.totalorder %s13, 3
      %p66 = scmp.ne.s32.totalorder %s61, %s63
      %p67 = scmp.eq.s32.totalorder %s13, 0
      %p68 = por %p66, %p67
      %p69 = scmp.ne.s32.totalorder %s61, %s63
      %p70 = scmp.eq.s32.totalorder %s18, 3
      %p71 = por %p69, %p70
      %p72 = scmp.ne.s32.totalorder %s63, %s64
      %p73 = scmp.eq.s32.totalorder %s18, 0
      %p74 = por %p72, %p73
      %p75 = scmp.ne.s32.totalorder %s63, %s64
      %p76 = scmp.eq.s32.totalorder %s19, 3
      %p77 = por %p75, %p76
      %p79 = scmp.ne.s32.totalorder %s64, %s78
      %p80 = scmp.eq.s32.totalorder %s19, 0
      %p81 = por %p79, %p80
      %s83 = sadd.s32 %s82, 1
      %p86 = scmp.eq.s32.totalorder %s13, 3
      %p87 = scmp.ne.s32.totalorder %s82, %s84
      %p88 = scmp.eq.s32.totalorder %s13, 0
      %p89 = por %p87, %p88
      %p90 = scmp.ne.s32.totalorder %s82, %s84
      %p91 = scmp.eq.s32.totalorder %s18, 3
      %p92 = por %p90, %p91
      %p93 = scmp.ne.s32.totalorder %s84, %s85
      %p94 = scmp.eq.s32.totalorder %s18, 0
      %p95 = por %p93, %p94
      %p96 = scmp.ne.s32.totalorder %s84, %s85
      %p97 = scmp.eq.s32.totalorder %s19, 3
      %p98 = por %p96, %p97
      %p100 = scmp.ne.s32.totalorder %s85, %s99
      %p101 = scmp.eq.s32.totalorder %s19, 0
      %p102 = por %p100, %p101
      %s104 = sadd.s32 %s103, 1
      %p107 = scmp.eq.s32.totalorder %s13, 3
      %p108 = scmp.ne.s32.totalorder %s103, %s105
      %p109 = scmp.eq.s32.totalorder %s13, 0
      %p110 = por %p108, %p109
      %p111 = scmp.ne.s32.totalorder %s103, %s105
      %p112 = scmp.eq.s32.totalorder %s18, 3
      %p113 = por %p111, %p112
      %p114 = scmp.ne.s32.totalorder %s105, %s106
      %p115 = scmp.eq.s32.totalorder %s18, 0
      %p116 = por %p114, %p115
      %p117 = scmp.ne.s32.totalorder %s105, %s106
      %p118 = scmp.eq.s32.totalorder %s19, 3
      %p119 = por %p117, %p118
      %p121 = scmp.ne.s32.totalorder %s106, %s120
      %p122 = scmp.eq.s32.totalorder %s19, 0
      %p123 = por %p121, %p122
      %s124 = ssub.s32 %s20, %s32
      %s125 = ssub.s32 %s21, %s28
      %s126 = sor.u32 %s124, %s125
      %p127 = scmp.eq.s32.totalorder %s126, 0
      %s129 = sadd.s32 %s128, 1
      %s130 = scalar_select %p127, %s128, %s129
      %p133 = pneg %p127
      %p134 = scmp.eq.s32.totalorder %s13, 3
      %p135 = por %p133, %p134
      %p136 = scmp.ne.s32.totalorder %s128, %s131
      %p137 = scmp.eq.s32.totalorder %s13, 0
      %p138 = por %p136, %p137
      %p139 = scmp.ne.s32.totalorder %s128, %s131
      %p140 = scmp.eq.s32.totalorder %s18, 3
      %p141 = por %p139, %p140
      %p142 = scmp.ne.s32.totalorder %s131, %s132
      %p143 = scmp.eq.s32.totalorder %s18, 0
      %p144 = por %p142, %p143
      %p145 = scmp.ne.s32.totalorder %s131, %s132
      %p146 = scmp.eq.s32.totalorder %s19, 3
      %p147 = por %p145, %p146
      %p149 = scmp.ne.s32.totalorder %s132, %s148
      %p150 = scmp.eq.s32.totalorder %s19, 0
      %p151 = por %p149, %p150
      %p152 = scmp.le.s32.totalorder 1, %s13
      %p153 = scmp.lt.s32.totalorder %s13, 5
      %p154 = pnand %p152, %p153
      %p155 = pneg %p154
      // Predicated region
      $region9: #{tpu_custom_call.1} parent=5 // pred_check
        _
      $region10: #{tpu_custom_call.1} parent=5 // pred_check_branch
        %157 = sbr.rel (%p154) target = $region12
      $region11: #{tpu_custom_call.1} parent=5 // pred_region
        %s158 = ssub.s32 %s13, 1
        // Predicated region
        $region13: #{tpu_custom_call.1} parent=11 // pred_check
          %p159 = pneg %p74
        $region14: #{tpu_custom_call.1} parent=11 // pred_check_branch
          %161 = sbr.rel (%p159) target = $region16
        $region15: #{tpu_custom_call.1} parent=11 // pred_region
          _
        $region16: #{tpu_custom_call.1} parent=11 // pred_fallthru
          _
        // Predicated region
        $region17: #{tpu_custom_call.1} parent=11 // pred_check
          %p162 = pneg %p95
        $region18: #{tpu_custom_call.1} parent=11 // pred_check_branch
          %164 = sbr.rel (%p162) target = $region20
        $region19: #{tpu_custom_call.1} parent=11 // pred_region
          _
        $region20: #{tpu_custom_call.1} parent=11 // pred_fallthru
          _
        // Predicated region
        $region21: #{tpu_custom_call.1} parent=11 // pred_check
          %p165 = pneg %p116
        $region22: #{tpu_custom_call.1} parent=11 // pred_check_branch
          %167 = sbr.rel (%p165) target = $region24
        $region23: #{tpu_custom_call.1} parent=11 // pred_region
          _
        $region24: #{tpu_custom_call.1} parent=11 // pred_fallthru
          _
      $region12: #{tpu_custom_call.1} parent=5 // pred_fallthru
        _
      %p168 = scmp.lt.s32.totalorder %s13, 4
      // Predicated region
      $region25: #{tpu_custom_call.1} parent=5 // pred_check
        %p169 = pneg %p168
      $region26: #{tpu_custom_call.1} parent=5 // pred_check_branch
        %171 = sbr.rel (%p169) target = $region28
      $region27: #{tpu_custom_call.1} parent=5 // pred_region
        // Predicated region
        $region29: #{tpu_custom_call.1} parent=27 // pred_check
          %p172 = pneg %p47
        $region30: #{tpu_custom_call.1} parent=27 // pred_check_branch
          %174 = sbr.rel (%p172) target = $region32
        $region31: #{tpu_custom_call.1} parent=27 // pred_region
          %p175 = scmp.lt.s32.totalorder %s20, 1
          %s176 = scalar_select %p175, %s20, 1
          %p177 = scmp.lt.s32.totalorder %s21, 1
          %s178 = scalar_select %p177, %s21, 1
          %s179 = smul.addr %s178, 2
          %s180 = smul.addr %s176, 4
          %s181 = sadd.s32 %s179, %s180
          %s182 = smul.addr %s181, 4
          %s183 = scalar_lea.vmem %s0, %s182
        $region32: #{tpu_custom_call.1} parent=27 // pred_fallthru
          _
      $region28: #{tpu_custom_call.1} parent=5 // pred_fallthru
        _
      %p184 = scmp.le.s32.totalorder 1, %s13
      %p185 = scmp.lt.s32.totalorder %s13, 5
      %p186 = pnand %p184, %p185
      %p187 = pneg %p186
      // Predicated region
      $region33: #{tpu_custom_call.1} parent=5 // pred_check
        _
      $region34: #{tpu_custom_call.1} parent=5 // pred_check_branch
        %189 = sbr.rel (%p186) target = $region36
      $region35: #{tpu_custom_call.1} parent=5 // pred_region
        %s190 = ssub.s32 %s13, 1
        %p191 = scmp.lt.s32.totalorder %s22, 1
        %s192 = scalar_select %p191, %s22, 1
        %p193 = scmp.lt.s32.totalorder %s23, 1
        %s194 = scalar_select %p193, %s23, 1
        %s195 = smul.addr %s194, 2
        %s196 = smul.addr %s192, 4
        %s197 = sadd.s32 %s195, %s196
        %s198 = smul.addr %s197, 4
        %s199 = scalar_lea.vmem %s0, %s198
        %p200 = pneg %p53
        %p201 = pneg %p50
        %p202 = pneg %p74
        %p203 = pneg %p71
        %p204 = pneg %p95
        %p205 = pneg %p92
        %p206 = pneg %p116
        %p207 = pneg %p113
        %p208 = pneg %p144
        %p209 = pneg %p141
        %s210 = sand.u32 %s131, 1
        %s211 = scalar_lea.sflag [#allocation3], %s210
        %s212 = sand.u32 %s131, 1
        %s213 = smul.addr %s212, 8
        %s214 = scalar_lea.vmem [#allocation2], %s213
        %p215 = scmp.lt.s32.totalorder %s22, 1
        %s216 = scalar_select %p215, %s22, 1
        %p217 = scmp.lt.s32.totalorder %s23, 1
        %s218 = scalar_select %p217, %s23, 1
        %s219 = smul.addr %s218, 2
        %s220 = smul.addr %s216, 4
        %s221 = sadd.s32 %s219, %s220
        %s222 = smul.addr %s221, 4
        %s223 = scalar_lea.vmem %s0, %s222
        %v224 = vld [vmem:[%s2] sm:$0x1]
        %v225 = vld [vmem:[%s2 + $0x1] sm:$0x1]
        %v226 = vld [vmem:[%s223] sm:$0x7]
        %227 = vrot.lane.b32.xlu0 %v226, 1
        %v228 = vpop.permute.xlu0 %227
        %v229 = vperm.slane %v224, 0
        %v230 = vmul.f32 %v228, %v229
        %231 = vrot.lane.b32.xlu0 %v226, 127
        %v232 = vpop.permute.xlu0 %231
        %v233 = vperm.slane %v225, 0
        %v234 = vmul.f32 %v232, %v233
        %v235 = vld [vmem:[%s1] sm:$0xff]
        %s236 = scalar_lea.vmem %s1, 8
        %v237 = vld [vmem:[%s236] sm:$0xff]
        %vm238 = vcmask 23552
        %v240 = vsel %vm238, %v237, 0
        %vm242 = vcmask 1042432
        %v244 = vsel %vm242, %v226, 0
        %246 = vmatpush.msra.mxu0 0.0
        %247 = vmatpush.msra.mxu0 0.0
        %248 = vmatpush.msra.mxu0 0.0
        %249 = vmatpush.msra.mxu0 0.0
        %250 = vmatpush.msra.mxu0 0.0
        %251 = vmatpush.msra.mxu0 0.0
        %252 = vmatpush.msra.mxu0 0.0
        %253 = vmatpush.msra.mxu0 0.0
        %254 = vmatpush.msra.mxu0 0.0
        %255 = vmatpush.msra.mxu0 0.0
        %256 = vmatpush.msra.mxu0 0.0
        %257 = vmatpush.msra.mxu0 0.0
        %258 = vmatpush.msra.mxu0 0.0
        %259 = vmatpush.msra.mxu0 0.0
        %260 = vmatpush.msra.mxu0 0.0
        %261 = vmatpush.msra.mxu0 %v244
        %262 = vmatmul.f32.gmra.mxu0 %v240
        %v263 = vpop.f32.mrf.mxu0
        %v264 = vadd.f32 0.0, %v263
        %265 = vdwg.mxu0
        %v267 = vsel %vm238, %v235, 0
        %v270 = vsel %vm242, %v230, 0
        %272 = vmatpush.msra.mxu0 0.0
        %273 = vmatpush.msra.mxu0 0.0
        %274 = vmatpush.msra.mxu0 0.0
        %275 = vmatpush.msra.mxu0 0.0
        %276 = vmatpush.msra.mxu0 0.0
        %277 = vmatpush.msra.mxu0 0.0
        %278 = vmatpush.msra.mxu0 0.0
        %279 = vmatpush.msra.mxu0 0.0
        %280 = vmatpush.msra.mxu0 0.0
        %281 = vmatpush.msra.mxu0 0.0
        %282 = vmatpush.msra.mxu0 0.0
        %283 = vmatpush.msra.mxu0 0.0
        %284 = vmatpush.msra.mxu0 0.0
        %285 = vmatpush.msra.mxu0 0.0
        %286 = vmatpush.msra.mxu0 0.0
        %287 = vmatpush.msra.mxu0 %v270
        %288 = vmatmul.f32.gmra.mxu0 %v267
        %v289 = vpop.f32.mrf.mxu0
        %v290 = vadd.f32 %v264, %v289
        %291 = vdwg.mxu0
        %s292 = scalar_lea.vmem %s1, 16
        %v293 = vld [vmem:[%s292] sm:$0xff]
        %v295 = vsel %vm238, %v293, 0
        %v298 = vsel %vm242, %v234, 0
        %300 = vmatpush.msra.mxu0 0.0
        %301 = vmatpush.msra.mxu0 0.0
        %302 = vmatpush.msra.mxu0 0.0
        %303 = vmatpush.msra.mxu0 0.0
        %304 = vmatpush.msra.mxu0 0.0
        %305 = vmatpush.msra.mxu0 0.0
        %306 = vmatpush.msra.mxu0 0.0
        %307 = vmatpush.msra.mxu0 0.0
        %308 = vmatpush.msra.mxu0 0.0
        %309 = vmatpush.msra.mxu0 0.0
        %310 = vmatpush.msra.mxu0 0.0
        %311 = vmatpush.msra.mxu0 0.0
        %312 = vmatpush.msra.mxu0 0.0
        %313 = vmatpush.msra.mxu0 0.0
        %314 = vmatpush.msra.mxu0 0.0
        %315 = vmatpush.msra.mxu0 %v298
        %316 = vmatmul.f32.gmra.mxu0 %v295
        %v317 = vpop.f32.mrf.mxu0
        %v318 = vadd.f32 0.0, %v317
        %319 = vdwg.mxu0
        %v320 = vadd.f32 %v290, %v318
        %v321 = vld [vmem:[%s223] sm:$0x77]
        %323 = vst [vmem:[#allocation1] ss:$2 sm:$0xff] %v321
        %v324 = vld.sshfl [vmem:[#allocation1] sm:$0xff pattern:$0x75316420]
        %v325 = vld.sshfl [vmem:[#allocation1 + $0x8] sm:$0xff pattern:$0x75316420]
        %326 = vrot.lane.b32.xlu0 %v324, 112
        %v327 = vpop.permute.xlu0 %326
        %328 = vrot.lane.b32.xlu0 %v325, 112
        %v329 = vpop.permute.xlu0 %328
        %vm330 = vcmask 916480
        %v331 = vsel %vm330, %v327, %v329
        %333 = vrot.lane.b32.xlu0 %v331, 1
        %v334 = vpop.permute.xlu0 %333
        %v335 = vmul.f32 %v334, %v229
        %336 = vst [vmem:[#allocation1] ss:$2 sm:$0xff] %v321
        %v337 = vld.sshfl [vmem:[#allocation1] sm:$0xff pattern:$0x75316420]
        %v338 = vld.sshfl [vmem:[#allocation1 + $0x8] sm:$0xff pattern:$0x75316420]
        %339 = vrot.lane.b32.xlu0 %v337, 112
        %v340 = vpop.permute.xlu0 %339
        %341 = vrot.lane.b32.xlu0 %v338, 112
        %v342 = vpop.permute.xlu0 %341
        %v343 = vsel %vm330, %v340, %v342
        %345 = vrot.lane.b32.xlu0 %v343, 127
        %v346 = vpop.permute.xlu0 %345
        %v347 = vmul.f32 %v346, %v233
        %s348 = scalar_lea.vmem %s1, 24
        %v349 = vld [vmem:[%s348] sm:$0xff]
        %v351 = vsel %vm238, %v349, 0
        %v354 = vsel %vm242, %v335, 0
        %356 = vmatpush.msra.mxu0 0.0
        %357 = vmatpush.msra.mxu0 0.0
        %358 = vmatpush.msra.mxu0 0.0
        %359 = vmatpush.msra.mxu0 0.0
        %360 = vmatpush.msra.mxu0 0.0
        %361 = vmatpush.msra.mxu0 0.0
        %362 = vmatpush.msra.mxu0 0.0
        %363 = vmatpush.msra.mxu0 0.0
        %364 = vmatpush.msra.mxu0 0.0
        %365 = vmatpush.msra.mxu0 0.0
        %366 = vmatpush.msra.mxu0 0.0
        %367 = vmatpush.msra.mxu0 0.0
        %368 = vmatpush.msra.mxu0 0.0
        %369 = vmatpush.msra.mxu0 0.0
        %370 = vmatpush.msra.mxu0 0.0
        %371 = vmatpush.msra.mxu0 %v354
        %372 = vmatmul.f32.gmra.mxu0 %v351
        %v373 = vpop.f32.mrf.mxu0
        %v374 = vadd.f32 0.0, %v373
        %375 = vdwg.mxu0
        %v376 = vadd.f32 %v320, %v374
        %s377 = scalar_lea.vmem %s1, 32
        %v378 = vld [vmem:[%s377] sm:$0xff]
        %379 = vst [vmem:[#allocation1] ss:$2 sm:$0xff] %v321
        %v380 = vld.sshfl [vmem:[#allocation1] sm:$0xff pattern:$0x75316420]
        %v381 = vld.sshfl [vmem:[#allocation1 + $0x8] sm:$0xff pattern:$0x75316420]
        %382 = vrot.lane.b32.xlu0 %v380, 112
        %v383 = vpop.permute.xlu0 %382
        %384 = vrot.lane.b32.xlu0 %v381, 112
        %v385 = vpop.permute.xlu0 %384
        %v386 = vsel %vm330, %v383, %v385
        %v388 = vsel %vm238, %v378, 0
        %v390 = vsel %vm242, %v386, 0
        %392 = vmatpush.msra.mxu0 0.0
        %393 = vmatpush.msra.mxu0 0.0
        %394 = vmatpush.msra.mxu0 0.0
        %395 = vmatpush.msra.mxu0 0.0
        %396 = vmatpush.msra.mxu0 0.0
        %397 = vmatpush.msra.mxu0 0.0
        %398 = vmatpush.msra.mxu0 0.0
        %399 = vmatpush.msra.mxu0 0.0
        %400 = vmatpush.msra.mxu0 0.0
        %401 = vmatpush.msra.mxu0 0.0
        %402 = vmatpush.msra.mxu0 0.0
        %403 = vmatpush.msra.mxu0 0.0
        %404 = vmatpush.msra.mxu0 0.0
        %405 = vmatpush.msra.mxu0 0.0
        %406 = vmatpush.msra.mxu0 0.0
        %407 = vmatpush.msra.mxu0 %v390
        %408 = vmatmul.f32.gmra.mxu0 %v388
        %v409 = vpop.f32.mrf.mxu0
        %v410 = vadd.f32 0.0, %v409
        %411 = vdwg.mxu0
        %v412 = vadd.f32 %v376, %v410
        %s413 = scalar_lea.vmem %s1, 40
        %v414 = vld [vmem:[%s413] sm:$0xff]
        %v416 = vsel %vm238, %v414, 0
        %v419 = vsel %vm242, %v347, 0
        %421 = vmatpush.msra.mxu0 0.0
        %422 = vmatpush.msra.mxu0 0.0
        %423 = vmatpush.msra.mxu0 0.0
        %424 = vmatpush.msra.mxu0 0.0
        %425 = vmatpush.msra.mxu0 0.0
        %426 = vmatpush.msra.mxu0 0.0
        %427 = vmatpush.msra.mxu0 0.0
        %428 = vmatpush.msra.mxu0 0.0
        %429 = vmatpush.msra.mxu0 0.0
        %430 = vmatpush.msra.mxu0 0.0
        %431 = vmatpush.msra.mxu0 0.0
        %432 = vmatpush.msra.mxu0 0.0
        %433 = vmatpush.msra.mxu0 0.0
        %434 = vmatpush.msra.mxu0 0.0
        %435 = vmatpush.msra.mxu0 0.0
        %436 = vmatpush.msra.mxu0 %v419
        %437 = vmatmul.f32.gmra.mxu0 %v416
        %v438 = vpop.f32.mrf.mxu0
        %v439 = vadd.f32 0.0, %v438
        %440 = vdwg.mxu0
        %v441 = vadd.f32 %v412, %v439
        %v442 = vld [vmem:[%s223] sm:$0x77]
        %444 = vst [vmem:[#allocation1] ss:$2 sm:$0xff] %v442
        %v445 = vld.sshfl [vmem:[#allocation1] sm:$0xff pattern:$0x75316420]
        %v446 = vld.sshfl [vmem:[#allocation1 + $0x8] sm:$0xff pattern:$0x75316420]
        %447 = vrot.lane.b32.xlu0 %v445, 96
        %v448 = vpop.permute.xlu0 %447
        %449 = vrot.lane.b32.xlu0 %v446, 96
        %v450 = vpop.permute.xlu0 %449
        %vm451 = vcmask 785408
        %v452 = vsel %vm451, %v448, %v450
        %454 = vrot.lane.b32.xlu0 %v452, 1
        %v455 = vpop.permute.xlu0 %454
        %v456 = vmul.f32 %v455, %v229
        %457 = vst [vmem:[#allocation1] ss:$2 sm:$0xff] %v442
        %v458 = vld.sshfl [vmem:[#allocation1] sm:$0xff pattern:$0x75316420]
        %v459 = vld.sshfl [vmem:[#allocation1 + $0x8] sm:$0xff pattern:$0x75316420]
        %460 = vrot.lane.b32.xlu0 %v458, 96
        %v461 = vpop.permute.xlu0 %460
        %462 = vrot.lane.b32.xlu0 %v459, 96
        %v463 = vpop.permute.xlu0 %462
        %v464 = vsel %vm451, %v461, %v463
        %466 = vrot.lane.b32.xlu0 %v464, 127
        %v467 = vpop.permute.xlu0 %466
        %v468 = vmul.f32 %v467, %v233
        %s469 = scalar_lea.vmem %s1, 48
        %v470 = vld [vmem:[%s469] sm:$0xff]
        %v472 = vsel %vm238, %v470, 0
        %v475 = vsel %vm242, %v456, 0
        %477 = vmatpush.msra.mxu0 0.0
        %478 = vmatpush.msra.mxu0 0.0
        %479 = vmatpush.msra.mxu0 0.0
        %480 = vmatpush.msra.mxu0 0.0
        %481 = vmatpush.msra.mxu0 0.0
        %482 = vmatpush.msra.mxu0 0.0
        %483 = vmatpush.msra.mxu0 0.0
        %484 = vmatpush.msra.mxu0 0.0
        %485 = vmatpush.msra.mxu0 0.0
        %486 = vmatpush.msra.mxu0 0.0
        %487 = vmatpush.msra.mxu0 0.0
        %488 = vmatpush.msra.mxu0 0.0
        %489 = vmatpush.msra.mxu0 0.0
        %490 = vmatpush.msra.mxu0 0.0
        %491 = vmatpush.msra.mxu0 0.0
        %492 = vmatpush.msra.mxu0 %v475
        %493 = vmatmul.f32.gmra.mxu0 %v472
        %v494 = vpop.f32.mrf.mxu0
        %v495 = vadd.f32 0.0, %v494
        %496 = vdwg.mxu0
        %v497 = vadd.f32 %v441, %v495
        %s498 = scalar_lea.vmem %s1, 56
        %v499 = vld [vmem:[%s498] sm:$0xff]
        %500 = vst [vmem:[#allocation1] ss:$2 sm:$0xff] %v442
        %v501 = vld.sshfl [vmem:[#allocation1] sm:$0xff pattern:$0x75316420]
        %v502 = vld.sshfl [vmem:[#allocation1 + $0x8] sm:$0xff pattern:$0x75316420]
        %503 = vrot.lane.b32.xlu0 %v501, 96
        %v504 = vpop.permute.xlu0 %503
        %505 = vrot.lane.b32.xlu0 %v502, 96
        %v506 = vpop.permute.xlu0 %505
        %v507 = vsel %vm451, %v504, %v506
        %v509 = vsel %vm238, %v499, 0
        %v511 = vsel %vm242, %v507, 0
        %513 = vmatpush.msra.mxu0 0.0
        %514 = vmatpush.msra.mxu0 0.0
        %515 = vmatpush.msra.mxu0 0.0
        %516 = vmatpush.msra.mxu0 0.0
        %517 = vmatpush.msra.mxu0 0.0
        %518 = vmatpush.msra.mxu0 0.0
        %519 = vmatpush.msra.mxu0 0.0
        %520 = vmatpush.msra.mxu0 0.0
        %521 = vmatpush.msra.mxu0 0.0
        %522 = vmatpush.msra.mxu0 0.0
        %523 = vmatpush.msra.mxu0 0.0
        %524 = vmatpush.msra.mxu0 0.0
        %525 = vmatpush.msra.mxu0 0.0
        %526 = vmatpush.msra.mxu0 0.0
        %527 = vmatpush.msra.mxu0 0.0
        %528 = vmatpush.msra.mxu0 %v511
        %529 = vmatmul.f32.gmra.mxu0 %v509
        %v530 = vpop.f32.mrf.mxu0
        %v531 = vadd.f32 0.0, %v530
        %532 = vdwg.mxu0
        %v533 = vadd.f32 %v497, %v531
        %s534 = scalar_lea.vmem %s1, 64
        %v535 = vld [vmem:[%s534] sm:$0xff]
        %v537 = vsel %vm238, %v535, 0
        %v540 = vsel %vm242, %v468, 0
        %542 = vmatpush.msra.mxu0 0.0
        %543 = vmatpush.msra.mxu0 0.0
        %544 = vmatpush.msra.mxu0 0.0
        %545 = vmatpush.msra.mxu0 0.0
        %546 = vmatpush.msra.mxu0 0.0
        %547 = vmatpush.msra.mxu0 0.0
        %548 = vmatpush.msra.mxu0 0.0
        %549 = vmatpush.msra.mxu0 0.0
        %550 = vmatpush.msra.mxu0 0.0
        %551 = vmatpush.msra.mxu0 0.0
        %552 = vmatpush.msra.mxu0 0.0
        %553 = vmatpush.msra.mxu0 0.0
        %554 = vmatpush.msra.mxu0 0.0
        %555 = vmatpush.msra.mxu0 0.0
        %556 = vmatpush.msra.mxu0 0.0
        %557 = vmatpush.msra.mxu0 %v540
        %558 = vmatmul.f32.gmra.mxu0 %v537
        %v559 = vpop.f32.mrf.mxu0
        %v560 = vadd.f32 0.0, %v559
        %561 = vdwg.mxu0
        %v562 = vadd.f32 %v533, %v560
        %v563 = vld [vmem:[%s3] sm:$0xff]
        %565 = vset.pattern.permute.xlu0 0
        %566 = vperm.xlu0 %565, %v563
        %v567 = vpop.permute.xlu0 %566
        %v569 = vadd.f32 %v562, %v567
        %v570 = vmax.f32 %v569, 0.0
        %571 = vst [vmem:[%s214] sm:$0xff] %v570
        %s572 = sand.u32 %s131, 1
        %s573 = scalar_lea.sflag [#allocation3], %s572
        %s574 = sand.u32 %s131, 1
        %s575 = smul.addr %s574, 8
        %s576 = scalar_lea.vmem [#allocation2], %s575
        // Predicated region
        $region37: #{tpu_custom_call.1} parent=35 // pred_check
          %p577 = pneg %p141
        $region38: #{tpu_custom_call.1} parent=35 // pred_check_branch
          %579 = sbr.rel (%p577) target = $region40
        $region39: #{tpu_custom_call.1} parent=35 // pred_region
          %581 = vsyncadd %s573, 0
          %s582 = smul.addr %s22, 2
          %s583 = sadd.s32 %s23, %s582
          %s584 = smul.addr %s583, 8
          %s585 = scalar_lea.hbm %s4, %s584
          %s587 = sshll.u32 %s576, 4
          %s588 = int_to_ptr.vmem [resolvable:$true] %s587
          %s589 = sshll.u32 %s585, 4
          %s590 = int_to_ptr.hbm [resolvable:$true] %s589
          %592 = dma.vmem_to_hbm [thread:$0]  %s588, 128, %s590, %s573
        $region40: #{tpu_custom_call.1} parent=35 // pred_fallthru
          _
      $region36: #{tpu_custom_call.1} parent=5 // pred_fallthru
        _
      %p593 = scmp.le.s32.totalorder 2, %s13
      // Predicated region
      $region41: #{tpu_custom_call.1} parent=5 // pred_check
        %p594 = pneg %p593
      $region42: #{tpu_custom_call.1} parent=5 // pred_check_branch
        %596 = sbr.rel (%p594) target = $region44
      $region43: #{tpu_custom_call.1} parent=5 // pred_region
        %s597 = ssub.s32 %s13, 2
        // Predicated region
        $region45: #{tpu_custom_call.1} parent=43 // pred_check
          %p598 = pneg %p147
        $region46: #{tpu_custom_call.1} parent=43 // pred_check_branch
          %600 = sbr.rel (%p598) target = $region48
        $region47: #{tpu_custom_call.1} parent=43 // pred_region
          %s601 = sand.u32 %s132, 1
          %s602 = scalar_lea.sflag [#allocation3], %s601
          %s603 = sand.u32 %s132, 1
          %s604 = smul.addr %s603, 8
          %s605 = scalar_lea.vmem [#allocation2], %s604
          %607 = dma.done %s602, 128
        $region48: #{tpu_custom_call.1} parent=43 // pred_fallthru
          _
      $region44: #{tpu_custom_call.1} parent=5 // pred_fallthru
        _
    $region6: #{tpu_custom_call.1} parent=1 // loop_footer
      %s17 = sadd.s32 1, %s13
    $region7: #{tpu_custom_call.1} parent=1 // loop_footer_branch
      %12 = sbr.rel target = $region3
    $region8: #{tpu_custom_call.1} parent=1 // loop_exit
      _
    %608 = vsyncpa [#allocation3], 1
    %s609 = scalar_lea.sflag [#allocation3], 1
    %610 = vsyncpa %s609, 1

</llo_original>
